<compile_context>
chip_gen: v7x
topology: tpu7x:2x2x1
jax: 0.10.0
libtpu: 0.0.40
codegen_flags: <defaults>
</compile_context>

<pallas_src>
import functools
import math

import jax
import jax.numpy as jnp
from jax.experimental import pallas as pl
from jax.experimental.pallas import tpu as pltpu

_LANE = 128
_SUBLANE = 8
_NEG_BIG = -1.0e30  # finite "-inf" for padded logit columns (keeps softmax exact)


# ----------------------------------------------------------------------------- helpers
def _round_up(x, m):
    return ((x + m - 1) // m) * m


def _vmem_capacity_bytes():
    try:
        return int(pltpu.get_tpu_info().vmem_capacity_bytes)
    except Exception:  # conservative fallback (v7x-sized)
        return 64 * 1024 * 1024


def _vmem_limit_bytes():
    # What we hand to the compiler.
    return _vmem_capacity_bytes() // 2


def _vmem_budget_bytes():
    # Tiling budget: same number the compiler sees, with ~20% headroom.
    return (_vmem_limit_bytes() * 4) // 5


def _fits_resident(in_dim, out_p, budget):
    """Can the whole bf16 weight live in VMEM alongside minimal x/out tiles?"""
    return (in_dim * out_p * 2 * 2            # bf16 weight (double-buffer allocation)
            + out_p * 4 * 2                   # f32 bias
            + _SUBLANE * in_dim * 4 * 2       # minimal f32 activation tile
            + _SUBLANE * out_p * 4 * 2        # minimal f32 output tile
            ) <= budget


def _fallback_tile_k(out_p, budget):
    """Largest K tile whose streamed bf16 weight tile still fits the VMEM budget."""
    for tk in (2048, 1024, 512, 256, 128):
        use = (tk * out_p * 2 * 2 + out_p * 4 * 2
               + _SUBLANE * tk * 4 * 2 + _SUBLANE * out_p * 4 * 2)
        if use <= budget:
            return tk
    # TODO(synk): tile out_p (N) as well for heads so wide that even a
    # (128, out_p) bf16 weight tile does not fit in VMEM.
    return _LANE


def _pick_tile_b(batch, k_cols, out_p, x_itemsize, fixed_bytes, budget, granule):
    b_r = _round_up(batch, granule)
    tile_b = min(512, b_r)
    # Split the batch into >= 2 tiles when there is enough of it so v7x's two
    # TensorCores ("parallel" axis) both get work; ~0.35us cost on 1-TC chips.
    if b_r >= 2 * granule:
        tile_b = min(tile_b, _round_up(pl.cdiv(b_r, 2), granule))

    def vmem_use(tb):
        return (fixed_bytes
                + tb * k_cols * x_itemsize * 2   # activation tile, double-buffered
                + tb * out_p * 4 * 2)            # f32 output tile, double-buffered

    while tile_b > granule and vmem_use(tile_b) > budget:
        tile_b = max(granule, _round_up(tile_b // 2, granule))
    return tile_b


# ----------------------------------------------------------------------------- kernel
def _epilogue(acc, b_ref, o_ref):
    # f32 bias add + log_softmax (f32 on purpose: exact, and v5e has no bf16 VPU/EUP).
    logits = acc + b_ref[...]                            # padded cols ~ -1e30
    m = jnp.max(logits, axis=-1, keepdims=True)          # XLU
    shifted = logits - m
    lse = jnp.log(jnp.sum(jnp.exp(shifted), axis=-1, keepdims=True))  # EUP/XLU
    o_ref[...] = (shifted - lse).astype(o_ref.dtype)


def _classifier_kernel(nk, x_ref, w_ref, b_ref, o_ref):
    # Cast activations to bf16 in-kernel (VPU work hidden under the MXU) --
    # no XLA-side cast/copy of the activation.
    acc = jnp.dot(x_ref[...].astype(jnp.bfloat16), w_ref[...],
                  preferred_element_type=jnp.float32)

    if nk == 1:
        # Common path: weight fully resident, single MXU dot, no accumulator traffic.
        _epilogue(acc, b_ref, o_ref)
    else:
        # Fallback (huge in_dim): accumulate directly into the f32, K-resident o_ref.
        k = pl.program_id(1)

        @pl.when(k == 0)
        def _():
            o_ref[...] = acc

        @pl.when((k > 0) & (k < nk - 1))
        def _():
            o_ref[...] += acc

        @pl.when(k == nk - 1)
        def _():
            _epilogue(o_ref[...] + acc, b_ref, o_ref)


# ----------------------------------------------------------------------------- wrapper
def prepare_classifier_params(weight, bias):
    """One-time parameter prep: transpose to (in, out), bf16 cast, lane-pad out_dim,
    and (only when the weight cannot be VMEM-resident) pad in_dim to the K tile."""
    out_dim, in_dim = weight.shape
    out_p = _round_up(out_dim, _LANE)
    budget = _vmem_budget_bytes()
    if _fits_resident(in_dim, out_p, budget):
        in_p = in_dim                         # no K padding needed at all
    else:
        in_p = _round_up(in_dim, _fallback_tile_k(out_p, budget))
    w = jnp.zeros((in_p, out_p), jnp.bfloat16)
    w = w.at[:in_dim, :out_dim].set(weight.T.astype(jnp.bfloat16))
    b = jnp.full((1, out_p), _NEG_BIG, jnp.float32)
    b = b.at[0, :out_dim].set(bias.astype(jnp.float32))
    return w, b


@functools.partial(jax.jit, static_argnames=("out_dim",))
def classifier_forward(lstm_out, w_p, b_p, *, out_dim):
    """lstm_out: (B, ...); w_p/b_p from prepare_classifier_params; returns (B, out_dim) f32."""
    B = lstm_out.shape[0]
    x = lstm_out.reshape(B, -1)               # view-like reshape; no copy, no cast
    if x.dtype not in (jnp.float32, jnp.bfloat16):
        x = x.astype(jnp.float32)
    in_dim = x.shape[1]
    in_p, out_p = w_p.shape
    assert in_p >= in_dim and out_p >= out_dim

    vmem_limit = _vmem_limit_bytes()
    budget = _vmem_budget_bytes()
    granule = 16 if x.dtype == jnp.bfloat16 else _SUBLANE   # bf16 packs 2 rows/sublane

    resident = _fits_resident(in_dim, out_p, budget)
    if resident:
        tile_k = in_dim                       # full-K block == full array extent
    else:
        tile_k = _fallback_tile_k(out_p, budget)
    assert in_p == (in_dim if resident else _round_up(in_dim, tile_k)), \
        "weight was prepared with a different plan; re-run prepare_classifier_params"
    nk = in_p // tile_k

    fixed_bytes = tile_k * out_p * 2 * 2 + out_p * 4 * 2      # weight tile(s) + bias
    tile_b = _pick_tile_b(B, tile_k, out_p, x.dtype.itemsize, fixed_bytes,
                          budget, granule)
    b_pad = _round_up(B, tile_b)

    pad_b = b_pad - B
    pad_k = (in_p - in_dim) if not resident else 0
    if pad_b or pad_k:                        # no-op on the common (aligned) path
        x = jnp.pad(x, ((0, pad_b), (0, pad_k)))

    grid = (b_pad // tile_b, nk)
    nb = grid[0]

    out = pl.pallas_call(
        functools.partial(_classifier_kernel, nk),
        out_shape=jax.ShapeDtypeStruct((b_pad, out_p), jnp.float32),
        grid_spec=pltpu.PrefetchScalarGridSpec(
            num_scalar_prefetch=0,
            grid=grid,
            in_specs=[
                pl.BlockSpec((tile_b, tile_k), lambda i, k: (i, k)),
                pl.BlockSpec((tile_k, out_p), lambda i, k: (k, 0)),
                pl.BlockSpec((1, out_p), lambda i, k: (0, 0)),
            ],
            out_specs=pl.BlockSpec((tile_b, out_p), lambda i, k: (i, 0)),
        ),
        compiler_params=pltpu.CompilerParams(
            dimension_semantics=("parallel", "arbitrary"),
            vmem_limit_bytes=vmem_limit,
        ),
        cost_estimate=pl.CostEstimate(
            flops=2 * b_pad * in_p * out_p,
            transcendentals=b_pad * out_p,
            bytes_accessed=(b_pad * in_p * x.dtype.itemsize
                            + (1 if nk == 1 else nb) * in_p * out_p * 2
                            + out_p * 4
                            + b_pad * out_p * 4),
        ),
    )(x, w_p, b_p)

    return out[:B, :out_dim]


# ----------------------------------------------------------------------------- demo / check
if __name__ == "__main__":
    # Small shapes consistent with the module: lstm_out (batch, seq, hidden),
    # flattened inside forward to input_dim = seq * hidden.
    batch, seq, hidden = 8, 4, 8
    input_dim = seq * hidden          # 32
    output_dim = 16

    key = jax.random.PRNGKey(0)
    k_x, k_w, k_b = jax.random.split(key, 3)

    lstm_out = jax.random.normal(k_x, (batch, seq, hidden), dtype=jnp.float32)

    # PyTorch-style Linear init: uniform(-1/sqrt(in_dim), 1/sqrt(in_dim)).
    bound = 1.0 / math.sqrt(input_dim)
    weight = jax.random.uniform(k_w, (output_dim, input_dim),
                                minval=-bound, maxval=bound, dtype=jnp.float32)
    bias = jax.random.uniform(k_b, (output_dim,),
                              minval=-bound, maxval=bound, dtype=jnp.float32)

    # One-time parameter prep (constant parameters -> outside the forward path).
    w_p, b_p = prepare_classifier_params(weight, bias)

    out = classifier_forward(lstm_out, w_p, b_p, out_dim=output_dim)
    out = jax.block_until_ready(out)

    # Reference with matching bf16 input/weight rounding (kernel feeds the MXU bf16,
    # accumulates f32; bias add + log_softmax are f32).
    x32 = lstm_out.reshape(batch, -1)
    x_bf = x32.astype(jnp.bfloat16).astype(jnp.float32)
    w_bf = weight.astype(jnp.bfloat16).astype(jnp.float32)
    logits_ref = x_bf @ w_bf.T + bias.astype(jnp.float32)
    ref = jax.nn.log_softmax(logits_ref, axis=-1)

    assert out.shape == (batch, output_dim)
    assert jnp.allclose(out, ref, atol=1e-4, rtol=1e-4), \
        float(jnp.max(jnp.abs(out - ref)))

    print("KERNEL_OK")
</pallas_src>

<mosaic_0001>
module attributes {stable_mosaic.version = 11 : i64} {
  func.func @_classifier_kernel(%arg0: i32, %arg1: i32, %arg2: memref<8x32xf32, #tpu.memory_space<vmem>>, %arg3: memref<32x128xbf16, #tpu.memory_space<vmem>>, %arg4: memref<1x128xf32, #tpu.memory_space<vmem>>, %arg5: memref<8x128xf32, #tpu.memory_space<vmem>>) attributes {dimension_semantics = [#tpu.dimension_semantics<parallel>, #tpu.dimension_semantics<arbitrary>], iteration_bounds = array<i64: 1, 1>, scalar_prefetch = 0 : i64, scratch_operands = 0 : i64, tpu.core_type = #tpu.core_type<tc>, window_params = [{transform_indices = @transform_0, window_bounds = array<i64: 8, 32>}, {transform_indices = @transform_1, window_bounds = array<i64: 32, 128>}, {pipeline_mode = #tpu.pipeline_mode<synchronous>, transform_indices = @transform_2, window_bounds = array<i64: 1, 128>}, {transform_indices = @transform_3, window_bounds = array<i64: 8, 128>}]} {
    %c0 = arith.constant 0 : index
    %c0_0 = arith.constant 0 : index
    %0 = vector.load %arg2[%c0, %c0_0] : memref<8x32xf32, #tpu.memory_space<vmem>>, vector<8x32xf32>
    %1 = arith.truncf %0 : vector<8x32xf32> to vector<8x32xbf16>
    %c0_1 = arith.constant 0 : index
    %c0_2 = arith.constant 0 : index
    %2 = vector.load %arg3[%c0_1, %c0_2] : memref<32x128xbf16, #tpu.memory_space<vmem>>, vector<32x128xbf16>
    %cst = arith.constant dense<0.000000e+00> : vector<8x128xf32>
    %3 = tpu.matmul %1, %2, %cst {dimension_numbers = #tpu.dot_dimension_numbers<[1], [0], [0], [1], [0, 0, 1, 1], [], []>} : vector<8x32xbf16>, vector<32x128xbf16>, vector<8x128xf32> -> vector<8x128xf32>
    %c0_3 = arith.constant 0 : index
    %c0_4 = arith.constant 0 : index
    %4 = vector.load %arg4[%c0_3, %c0_4] : memref<1x128xf32, #tpu.memory_space<vmem>>, vector<1x128xf32>
    %5 = vector.broadcast %4 : vector<1x128xf32> to vector<8x128xf32>
    %6 = arith.addf %3, %5 : vector<8x128xf32>
    %cst_5 = arith.constant dense<0xFF800000> : vector<8xf32>
    %7 = vector.multi_reduction <maximumf>, %6, %cst_5 [1] : vector<8x128xf32> to vector<8xf32>
    %8 = vector.shape_cast %7 : vector<8xf32> to vector<8x1xf32>
    %9 = vector.broadcast %8 : vector<8x1xf32> to vector<8x128xf32>
    %10 = arith.subf %6, %9 : vector<8x128xf32>
    %11 = math.exp %10 : vector<8x128xf32>
    %cst_6 = arith.constant dense<0.000000e+00> : vector<8xf32>
    %12 = vector.multi_reduction <add>, %11, %cst_6 [1] : vector<8x128xf32> to vector<8xf32>
    %13 = vector.shape_cast %12 : vector<8xf32> to vector<8x1xf32>
    %14 = math.log %13 : vector<8x1xf32>
    %15 = vector.broadcast %14 : vector<8x1xf32> to vector<8x128xf32>
    %16 = arith.subf %10, %15 : vector<8x128xf32>
    %c0_7 = arith.constant 0 : index
    %c0_8 = arith.constant 0 : index
    %17 = vector.load %arg5[%c0_7, %c0_8] : memref<8x128xf32, #tpu.memory_space<vmem>>, vector<8x128xf32>
    tpu.vector_store %arg5[%c0_7, %c0_8], %16 {strides = array<i32>} : memref<8x128xf32, #tpu.memory_space<vmem>>, vector<8x128xf32>,
    return
  }
  func.func @transform_0(%arg0: i32, %arg1: i32) -> (i32, i32) {
    %c0_i32 = arith.constant 0 : i32
    return %arg0, %arg1 : i32, i32
  }
  func.func @transform_1(%arg0: i32, %arg1: i32) -> (i32, i32) {
    %c0_i32 = arith.constant 0 : i32
    %c0_i32_0 = arith.constant 0 : i32
    return %arg1, %c0_i32 : i32, i32
  }
  func.func @transform_2(%arg0: i32, %arg1: i32) -> (i32, i32) {
    %c0_i32 = arith.constant 0 : i32
    %c0_i32_0 = arith.constant 0 : i32
    %c0_i32_1 = arith.constant 0 : i32
    return %c0_i32, %c0_i32_0 : i32, i32
  }
  func.func @transform_3(%arg0: i32, %arg1: i32) -> (i32, i32) {
    %c0_i32 = arith.constant 0 : i32
    %c0_i32_0 = arith.constant 0 : i32
    return %arg0, %c0_i32 : i32, i32
  }
}

</mosaic_0001>

<llo_original>
// kernel: classifier_forward.1
$region0: #{classifier_forward.1}
  #allocation0 [shape = 'u32[]', space=smem, size = 0x4, offset = 0x4, fixed_abs, tag = 'smem constant byte address 0x4 - core index']
  #allocation1 [shape = 'u32[144,128]{1,0:T(1,128)}', space=vmem, size = 0x12000, scoped, tag = 'internal scratch']
  %s0 = inlined_call_operand.vmem [shape: f32[8,32], index: 0, kind: input, shape index: {}]
  %s1 = inlined_call_operand.vmem [shape: bf16[32,128], index: 1, kind: input, shape index: {}]
  %s2 = inlined_call_operand.vmem [shape: f32[1,128], index: 2, kind: input, shape index: {}]
  %s3 = inlined_call_operand.hbm [shape: f32[8,128], index: 3, kind: output, shape index: {}]
  %s4 = sld [smem:[#allocation0]]
  $region22: #{classifier_forward.1} parent=0
    _
  %s6 = ssub.s32 1, %s4
  %s7 = scalar_select 0, %s6, %s4
  $region1: #{classifier_forward.1} parent=0
    #allocation2 [shape = 'u8[4096]{0}', space=vmem, size = 0x1000, scoped, tag = 'output window, operand 0, single buffered']
    #allocation3 [shape = 's32[1]{0}', space=sflag, size = 0x4, scoped, tag = 'scoped memory for classifier_forward.1']
    %8 = vsyncpa [#allocation3], 0
    // Predicated region
    $region2: #{classifier_forward.1} parent=1 // pred_check
      _
    $region3: #{classifier_forward.1} parent=1 // pred_check_branch
      %10 = sbr.rel (0) target = $region5
    $region4: #{classifier_forward.1} parent=1 // pred_region
      _
    $region5: #{classifier_forward.1} parent=1 // pred_fallthru
      _
    // Predicated region
    $region6: #{classifier_forward.1} parent=1 // pred_check
      _
    $region7: #{classifier_forward.1} parent=1 // pred_check_branch
      %12 = sbr.rel (0) target = $region9
    $region8: #{classifier_forward.1} parent=1 // pred_region
      _
    $region9: #{classifier_forward.1} parent=1 // pred_fallthru
      _
    // Predicated region
    $region10: #{classifier_forward.1} parent=1 // pred_check
      _
    $region11: #{classifier_forward.1} parent=1 // pred_check_branch
      %14 = sbr.rel (0) target = $region13
    $region12: #{classifier_forward.1} parent=1 // pred_region
      _
    $region13: #{classifier_forward.1} parent=1 // pred_fallthru
      _
    %v16 = vld [vmem:[%s0] sm:$0xff]
    %v17 = vpack.c.bf16 %v16, %v16
    %v18 = vld [vmem:[%s1] sm:$0xf]
    %v19 = vld [vmem:[%s1 + $0x4] sm:$0xf]
    %v20 = vld [vmem:[%s1 + $0x8] sm:$0xf]
    %v21 = vld [vmem:[%s1 + $0xc] sm:$0xf]
    %v22 = vld [vmem:[%s2] sm:$0x1]
    %v24 = vlaneseq
    %v25 = vshrl.u32 %v24, 7
    %v26 = vsub.s32 0, %v25
    %v27 = vrot.slane %v22, %v26
    %v33 = vunpack.c.l.b16 %v18
    %v34 = vunpack.c.l.b16 %v19
    %v35 = vunpack.c.l.b16 %v20
    %v36 = vunpack.c.l.b16 %v21
    %v37 = vpack.c.b16 %v34, %v33
    %v38 = vpack.c.b16 %v36, %v35
    %vm41 = vcmask 261120
    %v43 = vsel %vm41, %v17, 0
    %45 = vmatprep.subr.bf16.mxu0 0
    %46 = vmatpush1.bf16.msra.mxu0 %v37
    %47 = vmatprep.subr.bf16.mxu0 0
    %48 = vmatpush1.bf16.msra.mxu0 %v38
    %49 = vmatprep.subr.bf16.mxu0 0
    %50 = vmatpush1.bf16.msra.mxu0 0
    %51 = vmatprep.subr.bf16.mxu0 0
    %52 = vmatpush1.bf16.msra.mxu0 0
    %53 = vmatprep.subr.bf16.mxu0 0
    %54 = vmatpush1.bf16.msra.mxu0 0
    %55 = vmatprep.subr.bf16.mxu0 0
    %56 = vmatpush1.bf16.msra.mxu0 0
    %57 = vmatprep.subr.bf16.mxu0 0
    %58 = vmatpush1.bf16.msra.mxu0 0
    %59 = vmatprep.subr.bf16.mxu0 0
    %60 = vmatpush1.bf16.msra.mxu0 0
    %61 = vmatprep.subr.bf16.mxu0 0
    %62 = vmatpush1.bf16.msra.mxu0 0
    %63 = vmatprep.subr.bf16.mxu0 0
    %64 = vmatpush1.bf16.msra.mxu0 0
    %65 = vmatprep.subr.bf16.mxu0 0
    %66 = vmatpush1.bf16.msra.mxu0 0
    %67 = vmatprep.subr.bf16.mxu0 0
    %68 = vmatpush1.bf16.msra.mxu0 0
    %69 = vmatprep.subr.bf16.mxu0 0
    %70 = vmatpush1.bf16.msra.mxu0 0
    %71 = vmatprep.subr.bf16.mxu0 0
    %72 = vmatpush1.bf16.msra.mxu0 0
    %73 = vmatprep.subr.bf16.mxu0 0
    %74 = vmatpush1.bf16.msra.mxu0 0
    %75 = vmatprep.subr.bf16.mxu0 0
    %76 = vmatpush1.bf16.msra.mxu0 0
    %77 = vmatprep.mubr.bf16.mxu0 0
    %78 = vmatmul.mubr.bf16.gmra.mrb[0].mxu0 %v43
    %v79 = vpop.f32.mrb[0].mxu0
    %v80 = vadd.f32 %v27, %v79
    %v81 = vpop.f32.mrb[0].mxu0
    %v82 = vpop.f32.mrb[0].mxu0
    %v83 = vpop.f32.mrb[0].mxu0
    %84 = vdwg.mxu0
    %85 = vmax.xlane.f32.xlu0 %v80
    %v86 = vpop.xlane.xlu0 %85
    %v87 = vsub.f32 %v80, %v86
    %v88 = vmul.f32 %v87, 1.442695
    %v89 = vpow.pop %v88
    %90 = vadd.xlane.f32.xlu0 %v89
    %v91 = vpop.xlane.xlu0 %90
    %v92 = vlog2.pop %v91
    %v93 = vmul.f32 %v92, 0.6931472
    %v94 = vsub.f32 %v87, %v93
    %95 = vst [vmem:[#allocation2] sm:$0xff] %v94
    // Predicated region
    $region14: #{classifier_forward.1} parent=1 // pred_check
      _
    $region15: #{classifier_forward.1} parent=1 // pred_check_branch
      %97 = sbr.rel (0) target = $region17
    $region16: #{classifier_forward.1} parent=1 // pred_region
      %s99 = ssub.s32 128, 128
      %100 = vsyncadd [#allocation3], %s99
      %s102 = sshll.u32 [#allocation2], 4
      %s103 = int_to_ptr.vmem [resolvable:$true] %s102
      %105 = dma.vmem_to_hbm [thread:$0]  %s103, 128, %s3, [#allocation3]
    $region17: #{classifier_forward.1} parent=1 // pred_fallthru
      _
    // Predicated region
    $region18: #{classifier_forward.1} parent=1 // pred_check
      _
    $region19: #{classifier_forward.1} parent=1 // pred_check_branch
      %107 = sbr.rel (0) target = $region21
    $region20: #{classifier_forward.1} parent=1 // pred_region
      %108 = dma.done [#allocation3], 128
    $region21: #{classifier_forward.1} parent=1 // pred_fallthru
      _
    %109 = vsyncpa [#allocation3], 1

</llo_original>
